<compile_context>
chip_gen: v5e
topology: v5e:2x2
jax: 0.10.0
libtpu: 0.0.40
codegen_flags: <defaults>
</compile_context>

<pallas_src>
import functools

import jax
import jax.numpy as jnp
import numpy as np
from jax.experimental import pallas as pl
from jax.experimental.pallas import tpu as pltpu


def _round_up(a, b):
    return (a + b - 1) // b * b


# ------------------------------- kernel --------------------------------------
def _transition_kernel(x_ref, scale_ref, shift_ref, w_ref, b_ref, o_ref, acc_ref):
    """One (M-tile, Cout-tile, window-slot) grid step.

    x_ref:     (TM, Cin)  one pooling-window slab of the repacked input
                          (bf16 on the fast path, f32 on the exact path)
    scale_ref: (1, Cin)   folded BN scale = gamma * rsqrt(var + eps)   (f32)
    shift_ref: (1, Cin)   folded BN shift = beta - mean * scale        (f32)
    w_ref:     (Cin, TN)  1x1 conv weight slice, lane-padded           (MXU dtype)
    b_ref:     (1, TN)    conv bias slice                              (f32)
    o_ref:     (TM, TN)   output tile (written on the last window slot)
    acc_ref:   (TM, TN)   f32 running max over window slots (VMEM scratch)
    """
    k = pl.program_id(2)

    # BN + ReLU on the VPU in f32 (v5e has no bf16 VPU; cast only for the MXU).
    x = x_ref[...].astype(jnp.float32)
    a = jnp.maximum(x * scale_ref[...] + shift_ref[...], 0.0)

    # 1x1 conv == channel matmul; bf16 (or f32) operands, f32 accumulation.
    # TODO(synk): tiny Cin (< 128, as in the unit test) still uses the
    # lane-padded MXU path; a VPU FMA path would avoid the 128/Cin padding
    # waste, but real DenseNet transitions (Cin in the hundreds) never hit it.
    z = jnp.dot(a.astype(w_ref.dtype), w_ref[...],
                preferred_element_type=jnp.float32)            # (TM, TN) f32

    @pl.when(k == 0)
    def _init():
        acc_ref[...] = z

    @pl.when(k > 0)
    def _accumulate():
        acc_ref[...] = jnp.maximum(acc_ref[...], z)

    @pl.when(k == pl.num_programs(2) - 1)
    def _finalize():
        # Bias hoisted out of the max:  max(a + b, c + b) == max(a, c) + b.
        o_ref[...] = (acc_ref[...] + b_ref[...]).astype(o_ref.dtype)


# ---------------------------- tiling helpers ----------------------------------
def _vmem_budget_and_limit():
    """Scoped-VMEM limit to request + tile-choice budget (generation aware)."""
    try:
        phys = int(pltpu.get_tpu_info().vmem_capacity_bytes)
    except Exception:
        phys = 64 << 20                      # v7x has the smallest physical VMEM
    limit = min((phys * 3) // 4, 96 << 20)   # raise scoped default, keep headroom
    budget = (limit * 4) // 5                # what the tile chooser targets
    return budget, limit


def _choose_tiles(M, Cin, Cout, x_itemsize, out_itemsize, w_itemsize, budget):
    """Pick (TM, TN, padded Cout) under an explicit VMEM budget."""
    cin_l = _round_up(max(Cin, 1), 128)      # lane padding of x/w blocks in VMEM
    coutp = _round_up(max(Cout, 1), 128)

    # Output-channel tile: keep the resident (Cin, TN) weight block small for
    # very wide transitions (matters on v7x's 64 MiB); x is re-read per TN
    # tile, which is cheap once the x stream is bf16.
    tn = coutp
    while tn > 256 and 2 * cin_l * tn * w_itemsize > budget // 8:
        tn = _round_up(tn // 2, 128)
    coutp = _round_up(coutp, tn)

    # M tile: target >= 4 M tiles (>= 2 per TensorCore on v7x megacore) so the
    # x stream double-buffers against the MXU, but keep 256..512 rows for HBM
    # efficiency; 16-aligned for bf16 sublane packing.
    tm = min(512, max(256, _round_up(-(-M // 8), 16)))
    tm = min(tm, _round_up(M, 16))

    def est(tm_):
        x_blk = tm_ * cin_l * x_itemsize             # one xw buffer
        o_blk = tm_ * tn * out_itemsize              # one output buffer
        w_blk = cin_l * tn * w_itemsize
        acc = tm_ * tn * 4                           # running-max scratch
        interm = 3 * tm_ * cin_l * 4 + tm_ * tn * 4  # f32 upcast / BN / cast / z
        # x + out double-buffered; weights/bias charged double-buffered too
        # (their block indices are grid-invariant along i,k so Pallas skips
        # the per-step re-DMA, but we stay conservative on occupied VMEM).
        return 2 * x_blk + 2 * o_blk + 2 * w_blk + acc + interm

    while tm > 16 and est(tm) > budget:
        tm = max(16, _round_up(tm // 2, 16))
    return tm, tn, coutp


# ------------------------------- wrapper --------------------------------------
@functools.partial(
    jax.jit,
    static_argnames=("with_pool", "eps", "compute_dtype", "out_dtype",
                     "data_format"))
def transition_forward(x_nchw, gamma, beta, conv_w, conv_b, *,
                       with_pool=True, eps=1e-5, compute_dtype=jnp.bfloat16,
                       out_dtype=None, data_format="NCHW"):
    """Forward pass of Transition.  x_nchw: (N, Cin, H, W)."""
    N, Cin, H, W = x_nchw.shape
    Cout = conv_w.shape[0]
    out_dtype = jnp.dtype(x_nchw.dtype if out_dtype is None else out_dtype)
    compute_dtype = jnp.dtype(compute_dtype)
    x32 = x_nchw.astype(jnp.float32)

    # --- BatchNorm batch statistics (training mode, biased variance).
    #     Centered second moment: no E[x^2]-E[x]^2 cancellation.
    mean = jnp.mean(x32, axis=(0, 2, 3))
    var = jnp.mean(jnp.square(x32 - mean[None, :, None, None]), axis=(0, 2, 3))
    scale = gamma.astype(jnp.float32) * jax.lax.rsqrt(var + eps)     # (Cin,)
    shift = beta.astype(jnp.float32) - mean * scale                  # (Cin,)

    # --- ceil_mode pooling with odd H/W: edge-replicate x.  BN/ReLU/1x1-conv
    #     are pointwise, so pooling the replicated input == ceil-mode pooling.
    if with_pool and (H % 2 or W % 2):
        x32 = jnp.pad(x32, ((0, 0), (0, 0), (0, H % 2), (0, W % 2)), mode="edge")
        H, W = H + H % 2, W + W % 2

    # --- single fused repack to window-major, channels-last.  bf16 on the
    #     fast path halves the dominant HBM stream and the x VMEM block.
    xw_dtype = compute_dtype if compute_dtype.itemsize < 4 else jnp.dtype(jnp.float32)
    if with_pool:
        Ho, Wo, K = H // 2, W // 2, 4
        xw = (x32.reshape(N, Cin, Ho, 2, Wo, 2)
                 .transpose(3, 5, 0, 2, 4, 1)          # (dy, dx, N, Ho, Wo, Cin)
                 .reshape(K, N * Ho * Wo, Cin))
    else:
        Ho, Wo, K = H, W, 1
        xw = x32.transpose(0, 2, 3, 1).reshape(1, N * H * W, Cin)
    xw = xw.astype(xw_dtype)
    M = N * Ho * Wo

    # --- tiling with explicit, generation-aware VMEM budgeting.
    budget, vmem_limit = _vmem_budget_and_limit()
    TM, TN, Coutp = _choose_tiles(M, Cin, Cout, xw.dtype.itemsize,
                                  out_dtype.itemsize, compute_dtype.itemsize,
                                  budget)
    Mpad = _round_up(M, TM)
    if Mpad != M:
        xw = jnp.pad(xw, ((0, 0), (0, Mpad - M), (0, 0)))
    grid = (Mpad // TM, Coutp // TN, K)     # K last: reduction axis innermost

    # --- lane-dense weight / bias (Cout padded to a multiple of TN >= 128).
    w_t = jnp.zeros((Cin, Coutp), compute_dtype).at[:, :Cout].set(
        conv_w.reshape(Cout, Cin).T.astype(compute_dtype))
    bias = jnp.zeros((1, Coutp), jnp.float32).at[:, :Cout].set(
        conv_b.astype(jnp.float32).reshape(1, Cout))

    nt = Coutp // TN
    cost = pl.CostEstimate(
        flops=2 * K * Mpad * Cin * Coutp,
        transcendentals=0,
        bytes_accessed=(K * Mpad * Cin * xw.dtype.itemsize * nt
                        + Mpad * Coutp * out_dtype.itemsize
                        + Cin * Coutp * compute_dtype.itemsize
                        + 4 * (2 * Cin + Coutp)))

    out = pl.pallas_call(
        _transition_kernel,
        out_shape=jax.ShapeDtypeStruct((Mpad, Coutp), out_dtype),
        grid=grid,
        in_specs=[
            # One (TM, Cin) window slab per step (K dim squeezed out).
            pl.BlockSpec((None, TM, Cin), lambda i, j, k: (k, i, 0)),
            # Grid-invariant operands: constant block index => Pallas fetches
            # them once and skips the per-step re-DMA.
            pl.BlockSpec((1, Cin), lambda i, j, k: (0, 0)),
            pl.BlockSpec((1, Cin), lambda i, j, k: (0, 0)),
            pl.BlockSpec((Cin, TN), lambda i, j, k: (0, j)),
            pl.BlockSpec((1, TN), lambda i, j, k: (0, j)),
        ],
        out_specs=pl.BlockSpec((TM, TN), lambda i, j, k: (i, j)),
        scratch_shapes=[pltpu.VMEM((TM, TN), jnp.float32)],
        compiler_params=pltpu.CompilerParams(
            dimension_semantics=("parallel", "parallel", "arbitrary"),
            vmem_limit_bytes=vmem_limit),
        cost_estimate=cost,
    )(xw, scale.reshape(1, Cin), shift.reshape(1, Cin), w_t, bias)

    y = out[:M, :Cout].reshape(N, Ho, Wo, Cout)     # NHWC (slice fuses w/ reshape)
    if data_format == "NHWC":
        return y                                    # skip the trailing transpose
    return jnp.transpose(y, (0, 3, 1, 2))           # NCHW, like the PyTorch module


# --------------------------- pure-JAX reference --------------------------------
def transition_ref(x, gamma, beta, conv_w, conv_b, *, with_pool=True, eps=1e-5):
    mean = jnp.mean(x, axis=(0, 2, 3), keepdims=True)
    var = jnp.var(x, axis=(0, 2, 3), keepdims=True)
    g = gamma.reshape(1, -1, 1, 1)
    b = beta.reshape(1, -1, 1, 1)
    xn = (x - mean) * jax.lax.rsqrt(var + eps) * g + b
    xr = jnp.maximum(xn, 0.0)
    y = jnp.einsum('nchw,oc->nohw', xr, conv_w.reshape(conv_w.shape[0], -1))
    y = y + conv_b.reshape(1, -1, 1, 1)
    if with_pool:
        N, C, H, W = y.shape
        # ceil_mode=True 2x2/stride-2 max-pool: -inf-pad odd edges, then pool.
        y = jnp.pad(y, ((0, 0), (0, 0), (0, H % 2), (0, W % 2)),
                    constant_values=-jnp.inf)
        H, W = H + H % 2, W + W % 2
        y = y.reshape(N, C, H // 2, 2, W // 2, 2).max(axis=(3, 5))
    return y


if __name__ == "__main__":
    key = jax.random.PRNGKey(0)
    k_x, k_g, k_b, k_w, k_c = jax.random.split(key, 5)

    N, Cin, H, W = 2, 4, 16, 16
    Cout = 8

    gamma = jax.random.uniform(k_g, (Cin,), minval=0.5, maxval=1.5,
                               dtype=jnp.float32)
    beta = 0.1 * jax.random.normal(k_b, (Cin,), dtype=jnp.float32)
    conv_w = (jax.random.normal(k_w, (Cout, Cin, 1, 1), dtype=jnp.float32)
              / jnp.sqrt(Cin))
    conv_b = 0.05 * jax.random.normal(k_c, (Cout,), dtype=jnp.float32)

    def check(x, *, with_pool, compute_dtype, rtol, atol, data_format="NCHW"):
        y_ref = transition_ref(x, gamma, beta, conv_w, conv_b,
                               with_pool=with_pool)
        y = jax.block_until_ready(
            transition_forward(x, gamma, beta, conv_w, conv_b,
                               with_pool=with_pool,
                               compute_dtype=compute_dtype,
                               data_format=data_format))
        if data_format == "NHWC":
            y = jnp.transpose(y, (0, 3, 1, 2))
        assert y.shape == y_ref.shape, (y.shape, y_ref.shape)
        np.testing.assert_allclose(np.asarray(y), np.asarray(y_ref),
                                   rtol=rtol, atol=atol)

    x = jax.random.normal(k_x, (N, Cin, H, W), dtype=jnp.float32)

    # Exact f32 MXU path: tight tolerance.
    check(x, with_pool=True, compute_dtype=jnp.float32, rtol=1e-4, atol=1e-4)
    check(x, with_pool=False, compute_dtype=jnp.float32, rtol=1e-4, atol=1e-4)

    # Default bf16 MXU fast path (f32 accumulation): looser tolerance.
    check(x, with_pool=True, compute_dtype=jnp.bfloat16, rtol=1e-1, atol=1e-1)

    # NHWC output path (skips the trailing transpose).
    check(x, with_pool=True, compute_dtype=jnp.float32, rtol=1e-4, atol=1e-4,
          data_format="NHWC")

    # Odd spatial dims: ceil_mode pooling handled via edge replication.
    x_odd = jax.random.normal(k_x, (N, Cin, 15, 15), dtype=jnp.float32)
    check(x_odd, with_pool=True, compute_dtype=jnp.float32, rtol=1e-4, atol=1e-4)

    print("KERNEL_OK")
</pallas_src>

<mosaic_0001>
module attributes {stable_mosaic.version = 11 : i64} {
  func.func @_transition_kernel(%arg0: i32, %arg1: i32, %arg2: i32, %arg3: memref<1x128x4xf32, #tpu.memory_space<vmem>>, %arg4: memref<1x4xf32, #tpu.memory_space<vmem>>, %arg5: memref<1x4xf32, #tpu.memory_space<vmem>>, %arg6: memref<4x128xf32, #tpu.memory_space<vmem>>, %arg7: memref<1x128xf32, #tpu.memory_space<vmem>>, %arg8: memref<128x128xf32, #tpu.memory_space<vmem>>, %arg9: memref<128x128xf32, #tpu.memory_space<vmem>>) attributes {dimension_semantics = [#tpu.dimension_semantics<parallel>, #tpu.dimension_semantics<parallel>, #tpu.dimension_semantics<arbitrary>], iteration_bounds = array<i64: 1, 1, 4>, scalar_prefetch = 0 : i64, scratch_operands = 1 : i64, tpu.core_type = #tpu.core_type<tc>, window_params = [{transform_indices = @transform_0, window_bounds = array<i64: 1, 128, 4>}, {pipeline_mode = #tpu.pipeline_mode<synchronous>, transform_indices = @transform_1, window_bounds = array<i64: 1, 4>}, {pipeline_mode = #tpu.pipeline_mode<synchronous>, transform_indices = @transform_2, window_bounds = array<i64: 1, 4>}, {transform_indices = @transform_3, window_bounds = array<i64: 4, 128>}, {transform_indices = @transform_4, window_bounds = array<i64: 1, 128>}, {transform_indices = @transform_5, window_bounds = array<i64: 128, 128>}]} {
    %c0 = arith.constant 0 : index
    %c0_0 = arith.constant 0 : index
    %c0_1 = arith.constant 0 : index
    %0 = vector.load %arg3[%c0, %c0_0, %c0_1] : memref<1x128x4xf32, #tpu.memory_space<vmem>>, vector<1x128x4xf32>
    %1 = vector.shape_cast %0 : vector<1x128x4xf32> to vector<128x4xf32>
    %c0_2 = arith.constant 0 : index
    %c0_3 = arith.constant 0 : index
    %2 = vector.load %arg4[%c0_2, %c0_3] : memref<1x4xf32, #tpu.memory_space<vmem>>, vector<1x4xf32>
    %3 = vector.broadcast %2 : vector<1x4xf32> to vector<128x4xf32>
    %4 = arith.mulf %1, %3 : vector<128x4xf32>
    %c0_4 = arith.constant 0 : index
    %c0_5 = arith.constant 0 : index
    %5 = vector.load %arg5[%c0_4, %c0_5] : memref<1x4xf32, #tpu.memory_space<vmem>>, vector<1x4xf32>
    %6 = vector.broadcast %5 : vector<1x4xf32> to vector<128x4xf32>
    %7 = arith.addf %4, %6 : vector<128x4xf32>
    %cst = arith.constant 0.000000e+00 : f32
    %8 = vector.broadcast %cst : f32 to vector<128x4xf32>
    %9 = arith.maximumf %7, %8 : vector<128x4xf32>
    %c0_6 = arith.constant 0 : index
    %c0_7 = arith.constant 0 : index
    %10 = vector.load %arg6[%c0_6, %c0_7] : memref<4x128xf32, #tpu.memory_space<vmem>>, vector<4x128xf32>
    %cst_8 = arith.constant dense<0.000000e+00> : vector<128x128xf32>
    %11 = tpu.matmul %9, %10, %cst_8 {dimension_numbers = #tpu.dot_dimension_numbers<[1], [0], [0], [1], [0, 0, 1, 1], [], []>} : vector<128x4xf32>, vector<4x128xf32>, vector<128x128xf32> -> vector<128x128xf32>
    %c0_i32 = arith.constant 0 : i32
    %12 = arith.cmpi eq, %arg2, %c0_i32 : i32
    %13 = arith.extui %12 : i1 to i32
    %c0_i32_9 = arith.constant 0 : i32
    %14 = arith.cmpi ne, %13, %c0_i32_9 : i32
    scf.if %14 {
      %c0_13 = arith.constant 0 : index
      %c0_14 = arith.constant 0 : index
      %21 = vector.load %arg9[%c0_13, %c0_14] : memref<128x128xf32, #tpu.memory_space<vmem>>, vector<128x128xf32>
      tpu.vector_store %arg9[%c0_13, %c0_14], %11 {strides = array<i32>} : memref<128x128xf32, #tpu.memory_space<vmem>>, vector<128x128xf32>,
    } else {
    }
    %c0_i32_10 = arith.constant 0 : i32
    %15 = arith.cmpi sgt, %arg2, %c0_i32_10 : i32
    %16 = arith.extui %15 : i1 to i32
    %c0_i32_11 = arith.constant 0 : i32
    %17 = arith.cmpi ne, %16, %c0_i32_11 : i32
    scf.if %17 {
      %c0_13 = arith.constant 0 : index
      %c0_14 = arith.constant 0 : index
      %21 = vector.load %arg9[%c0_13, %c0_14] : memref<128x128xf32, #tpu.memory_space<vmem>>, vector<128x128xf32>
      %22 = arith.maximumf %21, %11 : vector<128x128xf32>
      %c0_15 = arith.constant 0 : index
      %c0_16 = arith.constant 0 : index
      %23 = vector.load %arg9[%c0_15, %c0_16] : memref<128x128xf32, #tpu.memory_space<vmem>>, vector<128x128xf32>
      tpu.vector_store %arg9[%c0_15, %c0_16], %22 {strides = array<i32>} : memref<128x128xf32, #tpu.memory_space<vmem>>, vector<128x128xf32>,
    } else {
    }
    %c3_i32 = arith.constant 3 : i32
    %18 = arith.cmpi eq, %arg2, %c3_i32 : i32
    %19 = arith.extui %18 : i1 to i32
    %c0_i32_12 = arith.constant 0 : i32
    %20 = arith.cmpi ne, %19, %c0_i32_12 : i32
    scf.if %20 {
      %c0_13 = arith.constant 0 : index
      %c0_14 = arith.constant 0 : index
      %21 = vector.load %arg9[%c0_13, %c0_14] : memref<128x128xf32, #tpu.memory_space<vmem>>, vector<128x128xf32>
      %c0_15 = arith.constant 0 : index
      %c0_16 = arith.constant 0 : index
      %22 = vector.load %arg7[%c0_15, %c0_16] : memref<1x128xf32, #tpu.memory_space<vmem>>, vector<1x128xf32>
      %23 = vector.broadcast %22 : vector<1x128xf32> to vector<128x128xf32>
      %24 = arith.addf %21, %23 : vector<128x128xf32>
      %c0_17 = arith.constant 0 : index
      %c0_18 = arith.constant 0 : index
      %25 = vector.load %arg8[%c0_17, %c0_18] : memref<128x128xf32, #tpu.memory_space<vmem>>, vector<128x128xf32>
      tpu.vector_store %arg8[%c0_17, %c0_18], %24 {strides = array<i32>} : memref<128x128xf32, #tpu.memory_space<vmem>>, vector<128x128xf32>,
    } else {
    }
    return
  }
  func.func @transform_0(%arg0: i32, %arg1: i32, %arg2: i32) -> (i32, i32, i32) {
    %c0_i32 = arith.constant 0 : i32
    %c0_i32_0 = arith.constant 0 : i32
    return %arg2, %arg0, %c0_i32 : i32, i32, i32
  }
  func.func @transform_1(%arg0: i32, %arg1: i32, %arg2: i32) -> (i32, i32) {
    %c0_i32 = arith.constant 0 : i32
    %c0_i32_0 = arith.constant 0 : i32
    %c0_i32_1 = arith.constant 0 : i32
    return %c0_i32, %c0_i32_0 : i32, i32
  }
  func.func @transform_2(%arg0: i32, %arg1: i32, %arg2: i32) -> (i32, i32) {
    %c0_i32 = arith.constant 0 : i32
    %c0_i32_0 = arith.constant 0 : i32
    %c0_i32_1 = arith.constant 0 : i32
    return %c0_i32, %c0_i32_0 : i32, i32
  }
  func.func @transform_3(%arg0: i32, %arg1: i32, %arg2: i32) -> (i32, i32) {
    %c0_i32 = arith.constant 0 : i32
    %c0_i32_0 = arith.constant 0 : i32
    return %c0_i32, %arg1 : i32, i32
  }
  func.func @transform_4(%arg0: i32, %arg1: i32, %arg2: i32) -> (i32, i32) {
    %c0_i32 = arith.constant 0 : i32
    %c0_i32_0 = arith.constant 0 : i32
    return %c0_i32, %arg1 : i32, i32
  }
  func.func @transform_5(%arg0: i32, %arg1: i32, %arg2: i32) -> (i32, i32) {
    %c0_i32 = arith.constant 0 : i32
    return %arg0, %arg1 : i32, i32
  }
}

</mosaic_0001>

<llo_original>
// kernel: transition_forward.1
$region0: #{transition_forward.1}
  #allocation0 [shape = 'u32[]', space=smem, size = 0x4, offset = 0x4, fixed_abs, tag = 'smem constant byte address 0x4 - core index']
  #allocation1 [shape = 'u32[72,128]{1,0:T(1,128)}', space=vmem, size = 0x9000, scoped, tag = 'internal scratch']
  #allocation2 [shape = 'f32[128,128]{1,0:T(8,128)}', space=vmem, size = 0x10000, scoped, tag = 'scratch operand']
  %s0 = inlined_call_operand.vmem [shape: f32[4,128,4], index: 0, kind: input, shape index: {}]
  %s1 = inlined_call_operand.vmem [shape: f32[1,4], index: 1, kind: input, shape index: {}]
  %s2 = inlined_call_operand.vmem [shape: f32[1,4], index: 2, kind: input, shape index: {}]
  %s3 = inlined_call_operand.vmem [shape: f32[4,128], index: 3, kind: input, shape index: {}]
  %s4 = inlined_call_operand.vmem [shape: f32[1,128], index: 4, kind: input, shape index: {}]
  %s5 = inlined_call_operand.vmem [shape: f32[128,128], index: 5, kind: output, shape index: {}]
  %s6 = sld [smem:[#allocation0]]
  $region65: #{transition_forward.1} parent=0
    _
  %s8 = ssub.s32 1, %s6
  %s9 = scalar_select 0, %s8, %s6
  loop: start=0, step=1, limit=6
  $region2: #{transition_forward.1} parent=0 // loop_pre_header
    _
  $region3: #{transition_forward.1} parent=0 // loop_header
    %s11 = sphi 0, %s15
    %p12 = scmp.ge.s32.totalorder %s11, 6
    %s18 = sphi 0, %s37
    %s19 = sphi 0, %s33
    %s20 = sphi 0, %s29
    %s21 = sphi 0, %s18
    %s22 = sphi 0, %s19
    %s23 = sphi 0, %s20
    %s24 = sphi 0, %s21
    %s25 = sphi 0, %s22
    %s26 = sphi 0, %s23
    %s42 = sphi 0, %s44
    %s45 = sphi 0, %s42
    %s46 = sphi 0, %s45
    %s62 = sphi 0, %s46
    %s66 = sphi 0, %s66
    %s68 = sphi 0, %s66
    %s69 = sphi 0, %s68
    %s83 = sphi 0, %s69
    %s87 = sphi 0, %s87
    %s89 = sphi 0, %s87
    %s90 = sphi 0, %s89
    %s104 = sphi 0, %s90
    %s110 = sphi 0, %s112
    %s113 = sphi 0, %s110
    %s114 = sphi 0, %s113
    %s130 = sphi 0, %s114
    %s136 = sphi 0, %s138
    %s139 = sphi 0, %s136
    %s140 = sphi 0, %s139
    %s156 = sphi 0, %s140
    %s164 = sphi 0, %s166
    %s167 = sphi 0, %s164
    %s168 = sphi 0, %s167
    %s184 = sphi 0, %s168
  $region4: #{transition_forward.1} parent=0 // loop_header_branch
    %14 = sbr.rel (%p12) target = $region8
  $region5: #{transition_forward.1} parent=0 // loop_body
    %s16 = ssub.s32 %s11, 1
    %s17 = ssub.s32 %s11, 2
    %s27 = sadd.s32 1, %s20
    %p28 = scmp.ge.s32.totalorder %s27, 4
    %s29 = scalar_select %p28, 0, %s27
    %s30 = sadd.s32 1, %s19
    %s31 = scalar_select %p28, %s30, %s19
    %p32 = scmp.ge.s32.totalorder %s31, 1
    %s33 = scalar_select %p32, 0, %s31
    %s34 = sadd.s32 1, %s18
    %s35 = scalar_select %p32, %s34, %s18
    %p36 = scmp.ge.s32.totalorder %s35, 1
    %s37 = scalar_select %p36, 0, %s35
    %s38 = ssub.s32 %s20, %s29
    %s39 = ssub.s32 %s18, %s37
    %s40 = sor.u32 %s38, %s39
    %p41 = scmp.eq.s32.totalorder %s40, 0
    %s43 = sadd.s32 %s42, 1
    %s44 = scalar_select %p41, %s42, %s43
    %p47 = pneg %p41
    %p48 = scmp.eq.s32.totalorder %s11, 3
    %p49 = por %p47, %p48
    %p50 = scmp.ne.s32.totalorder %s42, %s45
    %p51 = scmp.eq.s32.totalorder %s11, 0
    %p52 = por %p50, %p51
    %p53 = scmp.ne.s32.totalorder %s42, %s45
    %p54 = scmp.eq.s32.totalorder %s16, 3
    %p55 = por %p53, %p54
    %p56 = scmp.ne.s32.totalorder %s45, %s46
    %p57 = scmp.eq.s32.totalorder %s16, 0
    %p58 = por %p56, %p57
    %p59 = scmp.ne.s32.totalorder %s45, %s46
    %p60 = scmp.eq.s32.totalorder %s17, 3
    %p61 = por %p59, %p60
    %p63 = scmp.ne.s32.totalorder %s46, %s62
    %p64 = scmp.eq.s32.totalorder %s17, 0
    %p65 = por %p63, %p64
    %s67 = sadd.s32 %s66, 1
    %p70 = scmp.eq.s32.totalorder %s11, 3
    %p71 = scmp.ne.s32.totalorder %s66, %s68
    %p72 = scmp.eq.s32.totalorder %s11, 0
    %p73 = por %p71, %p72
    %p74 = scmp.ne.s32.totalorder %s66, %s68
    %p75 = scmp.eq.s32.totalorder %s16, 3
    %p76 = por %p74, %p75
    %p77 = scmp.ne.s32.totalorder %s68, %s69
    %p78 = scmp.eq.s32.totalorder %s16, 0
    %p79 = por %p77, %p78
    %p80 = scmp.ne.s32.totalorder %s68, %s69
    %p81 = scmp.eq.s32.totalorder %s17, 3
    %p82 = por %p80, %p81
    %p84 = scmp.ne.s32.totalorder %s69, %s83
    %p85 = scmp.eq.s32.totalorder %s17, 0
    %p86 = por %p84, %p85
    %s88 = sadd.s32 %s87, 1
    %p91 = scmp.eq.s32.totalorder %s11, 3
    %p92 = scmp.ne.s32.totalorder %s87, %s89
    %p93 = scmp.eq.s32.totalorder %s11, 0
    %p94 = por %p92, %p93
    %p95 = scmp.ne.s32.totalorder %s87, %s89
    %p96 = scmp.eq.s32.totalorder %s16, 3
    %p97 = por %p95, %p96
    %p98 = scmp.ne.s32.totalorder %s89, %s90
    %p99 = scmp.eq.s32.totalorder %s16, 0
    %p100 = por %p98, %p99
    %p101 = scmp.ne.s32.totalorder %s89, %s90
    %p102 = scmp.eq.s32.totalorder %s17, 3
    %p103 = por %p101, %p102
    %p105 = scmp.ne.s32.totalorder %s90, %s104
    %p106 = scmp.eq.s32.totalorder %s17, 0
    %p107 = por %p105, %p106
    %s108 = ssub.s32 %s19, %s33
    %p109 = scmp.eq.s32.totalorder %s108, 0
    %s111 = sadd.s32 %s110, 1
    %s112 = scalar_select %p109, %s110, %s111
    %p115 = pneg %p109
    %p116 = scmp.eq.s32.totalorder %s11, 3
    %p117 = por %p115, %p116
    %p118 = scmp.ne.s32.totalorder %s110, %s113
    %p119 = scmp.eq.s32.totalorder %s11, 0
    %p120 = por %p118, %p119
    %p121 = scmp.ne.s32.totalorder %s110, %s113
    %p122 = scmp.eq.s32.totalorder %s16, 3
    %p123 = por %p121, %p122
    %p124 = scmp.ne.s32.totalorder %s113, %s114
    %p125 = scmp.eq.s32.totalorder %s16, 0
    %p126 = por %p124, %p125
    %p127 = scmp.ne.s32.totalorder %s113, %s114
    %p128 = scmp.eq.s32.totalorder %s17, 3
    %p129 = por %p127, %p128
    %p131 = scmp.ne.s32.totalorder %s114, %s130
    %p132 = scmp.eq.s32.totalorder %s17, 0
    %p133 = por %p131, %p132
    %s134 = ssub.s32 %s19, %s33
    %p135 = scmp.eq.s32.totalorder %s134, 0
    %s137 = sadd.s32 %s136, 1
    %s138 = scalar_select %p135, %s136, %s137
    %p141 = pneg %p135
    %p142 = scmp.eq.s32.totalorder %s11, 3
    %p143 = por %p141, %p142
    %p144 = scmp.ne.s32.totalorder %s136, %s139
    %p145 = scmp.eq.s32.totalorder %s11, 0
    %p146 = por %p144, %p145
    %p147 = scmp.ne.s32.totalorder %s136, %s139
    %p148 = scmp.eq.s32.totalorder %s16, 3
    %p149 = por %p147, %p148
    %p150 = scmp.ne.s32.totalorder %s139, %s140
    %p151 = scmp.eq.s32.totalorder %s16, 0
    %p152 = por %p150, %p151
    %p153 = scmp.ne.s32.totalorder %s139, %s140
    %p154 = scmp.eq.s32.totalorder %s17, 3
    %p155 = por %p153, %p154
    %p157 = scmp.ne.s32.totalorder %s140, %s156
    %p158 = scmp.eq.s32.totalorder %s17, 0
    %p159 = por %p157, %p158
    %s160 = ssub.s32 %s18, %s37
    %s161 = ssub.s32 %s19, %s33
    %s162 = sor.u32 %s160, %s161
    %p163 = scmp.eq.s32.totalorder %s162, 0
    %s165 = sadd.s32 %s164, 1
    %s166 = scalar_select %p163, %s164, %s165
    %p169 = pneg %p163
    %p170 = scmp.eq.s32.totalorder %s11, 3
    %p171 = por %p169, %p170
    %p172 = scmp.ne.s32.totalorder %s164, %s167
    %p173 = scmp.eq.s32.totalorder %s11, 0
    %p174 = por %p172, %p173
    %p175 = scmp.ne.s32.totalorder %s164, %s167
    %p176 = scmp.eq.s32.totalorder %s16, 3
    %p177 = por %p175, %p176
    %p178 = scmp.ne.s32.totalorder %s167, %s168
    %p179 = scmp.eq.s32.totalorder %s16, 0
    %p180 = por %p178, %p179
    %p181 = scmp.ne.s32.totalorder %s167, %s168
    %p182 = scmp.eq.s32.totalorder %s17, 3
    %p183 = por %p181, %p182
    %p185 = scmp.ne.s32.totalorder %s168, %s184
    %p186 = scmp.eq.s32.totalorder %s17, 0
    %p187 = por %p185, %p186
    %p188 = scmp.le.s32.totalorder 1, %s11
    %p189 = scmp.lt.s32.totalorder %s11, 5
    %p190 = pnand %p188, %p189
    %p191 = pneg %p190
    // Predicated region
    $region9: #{transition_forward.1} parent=5 // pred_check
      _
    $region10: #{transition_forward.1} parent=5 // pred_check_branch
      %193 = sbr.rel (%p190) target = $region12
    $region11: #{transition_forward.1} parent=5 // pred_region
      %s194 = ssub.s32 %s11, 1
      // Predicated region
      $region13: #{transition_forward.1} parent=11 // pred_check
        %p195 = pneg %p79
      $region14: #{transition_forward.1} parent=11 // pred_check_branch
        %197 = sbr.rel (%p195) target = $region16
      $region15: #{transition_forward.1} parent=11 // pred_region
        _
      $region16: #{transition_forward.1} parent=11 // pred_fallthru
        _
      // Predicated region
      $region17: #{transition_forward.1} parent=11 // pred_check
        %p198 = pneg %p100
      $region18: #{transition_forward.1} parent=11 // pred_check_branch
        %200 = sbr.rel (%p198) target = $region20
      $region19: #{transition_forward.1} parent=11 // pred_region
        _
      $region20: #{transition_forward.1} parent=11 // pred_fallthru
        _
      // Predicated region
      $region21: #{transition_forward.1} parent=11 // pred_check
        %p201 = pneg %p126
      $region22: #{transition_forward.1} parent=11 // pred_check_branch
        %203 = sbr.rel (%p201) target = $region24
      $region23: #{transition_forward.1} parent=11 // pred_region
        %p204 = scmp.lt.s32.totalorder %s22, 0
        %s205 = scalar_select %p204, %s22, 0
        %s206 = smul.addr %s205, 4
        %s207 = scalar_lea.vmem %s3, %s206
      $region24: #{transition_forward.1} parent=11 // pred_fallthru
        _
      // Predicated region
      $region25: #{transition_forward.1} parent=11 // pred_check
        %p208 = pneg %p152
      $region26: #{transition_forward.1} parent=11 // pred_check_branch
        %210 = sbr.rel (%p208) target = $region28
      $region27: #{transition_forward.1} parent=11 // pred_region
        %p211 = scmp.lt.s32.totalorder %s22, 0
        %s212 = scalar_select %p211, %s22, 0
        %s213 = scalar_lea.vmem %s4, %s212
      $region28: #{transition_forward.1} parent=11 // pred_fallthru
        _
    $region12: #{transition_forward.1} parent=5 // pred_fallthru
      _
    %p214 = scmp.lt.s32.totalorder %s11, 4
    // Predicated region
    $region29: #{transition_forward.1} parent=5 // pred_check
      %p215 = pneg %p214
    $region30: #{transition_forward.1} parent=5 // pred_check_branch
      %217 = sbr.rel (%p215) target = $region32
    $region31: #{transition_forward.1} parent=5 // pred_region
      // Predicated region
      $region33: #{transition_forward.1} parent=31 // pred_check
        %p218 = pneg %p52
      $region34: #{transition_forward.1} parent=31 // pred_check_branch
        %220 = sbr.rel (%p218) target = $region36
      $region35: #{transition_forward.1} parent=31 // pred_region
        %s221 = smul.u32 16, %s18
        %p222 = scmp.lt.s32.totalorder %s20, 3
        %s223 = scalar_select %p222, %s20, 3
        %p224 = scmp.lt.s32.totalorder %s221, 15
        %s225 = scalar_select %p224, %s221, 15
        %s226 = smul.addr %s223, 16
        %s227 = sadd.s32 %s225, %s226
        %s228 = smul.addr %s227, 8
        %s229 = scalar_lea.vmem %s0, %s228
        %s230 = smul.u32 16, %s18
      $region36: #{transition_forward.1} parent=31 // pred_fallthru
        _
    $region32: #{transition_forward.1} parent=5 // pred_fallthru
      _
    %p231 = scmp.le.s32.totalorder 1, %s11
    %p232 = scmp.lt.s32.totalorder %s11, 5
    %p233 = pnand %p231, %p232
    %p234 = pneg %p233
    // Predicated region
    $region37: #{transition_forward.1} parent=5 // pred_check
      _
    $region38: #{transition_forward.1} parent=5 // pred_check_branch
      %236 = sbr.rel (%p233) target = $region40
    $region39: #{transition_forward.1} parent=5 // pred_region
      %s237 = ssub.s32 %s11, 1
      %s238 = smul.u32 16, %s21
      %p239 = scmp.lt.s32.totalorder %s23, 3
      %s240 = scalar_select %p239, %s23, 3
      %p241 = scmp.lt.s32.totalorder %s238, 15
      %s242 = scalar_select %p241, %s238, 15
      %s243 = smul.addr %s240, 16
      %s244 = sadd.s32 %s242, %s243
      %s245 = smul.addr %s244, 8
      %s246 = scalar_lea.vmem %s0, %s245
      %p247 = pneg %p58
      %p248 = pneg %p55
      %p249 = pneg %p79
      %p250 = pneg %p76
      %p251 = pneg %p100
      %p252 = pneg %p97
      %p253 = scmp.lt.s32.totalorder %s22, 0
      %s254 = scalar_select %p253, %s22, 0
      %s255 = smul.addr %s254, 4
      %s256 = scalar_lea.vmem %s3, %s255
      %p257 = pneg %p126
      %p258 = pneg %p123
      %p259 = scmp.lt.s32.totalorder %s22, 0
      %s260 = scalar_select %p259, %s22, 0
      %s261 = scalar_lea.vmem %s4, %s260
      %p262 = pneg %p152
      %p263 = pneg %p149
      %p264 = pneg %p180
      %p265 = pneg %p177
      %s266 = smul.u32 16, %s21
      %p267 = scmp.lt.s32.totalorder %s266, 15
      %s268 = scalar_select %p267, %s266, 15
      %p269 = scmp.lt.s32.totalorder %s22, 0
      %s270 = scalar_select %p269, %s22, 0
      %s271 = sadd.s32 %s270, %s268
      %s272 = smul.addr %s271, 8
      %s273 = scalar_lea.vmem %s5, %s272
      %s274 = smul.u32 16, %s21
      %p275 = scmp.lt.s32.totalorder %s23, 3
      %s276 = scalar_select %p275, %s23, 3
      %p277 = scmp.lt.s32.totalorder %s274, 15
      %s278 = scalar_select %p277, %s274, 15
      %s279 = smul.addr %s276, 16
      %s280 = sadd.s32 %s278, %s279
      %s281 = smul.addr %s280, 8
      %s282 = scalar_lea.vmem %s0, %s281
      %s283 = smul.u32 16, %s21
      %p284 = scmp.lt.s32.totalorder %s22, 0
      %s285 = scalar_select %p284, %s22, 0
      %s286 = smul.addr %s285, 4
      %s287 = scalar_lea.vmem %s3, %s286
      %p288 = scmp.lt.s32.totalorder %s22, 0
      %s289 = scalar_select %p288, %s22, 0
      %s290 = scalar_lea.vmem %s4, %s289
      %s291 = smul.u32 16, %s21
      %p292 = scmp.lt.s32.totalorder %s291, 15
      %s293 = scalar_select %p292, %s291, 15
      %p294 = scmp.lt.s32.totalorder %s22, 0
      %s295 = scalar_select %p294, %s22, 0
      %s296 = sadd.s32 %s295, %s293
      %s297 = smul.addr %s296, 8
      %s298 = scalar_lea.vmem %s5, %s297
      %s299 = smul.u32 16, %s21
      %v300 = vld [vmem:[%s282] sm:$0xff]
      %v301 = vld [vmem:[%s282 + $0x8] sm:$0xff]
      %v302 = vld [vmem:[%s282 + $0x10] sm:$0xff]
      %v303 = vld [vmem:[%s282 + $0x18] sm:$0xff]
      %v304 = vld [vmem:[%s282 + $0x20] sm:$0xff]
      %v305 = vld [vmem:[%s282 + $0x28] sm:$0xff]
      %v306 = vld [vmem:[%s282 + $0x30] sm:$0xff]
      %v307 = vld [vmem:[%s282 + $0x38] sm:$0xff]
      %v308 = vld [vmem:[%s282 + $0x40] sm:$0xff]
      %v309 = vld [vmem:[%s282 + $0x48] sm:$0xff]
      %v310 = vld [vmem:[%s282 + $0x50] sm:$0xff]
      %v311 = vld [vmem:[%s282 + $0x58] sm:$0xff]
      %v312 = vld [vmem:[%s282 + $0x60] sm:$0xff]
      %v313 = vld [vmem:[%s282 + $0x68] sm:$0xff]
      %v314 = vld [vmem:[%s282 + $0x70] sm:$0xff]
      %v315 = vld [vmem:[%s282 + $0x78] sm:$0xff]
      %v316 = vld [vmem:[%s1] sm:$0x1]
      %v318 = vperm.slane %v316, 0
      %v320 = vmul.f32 %v300, %v318
      %v321 = vmul.f32 %v301, %v318
      %v322 = vmul.f32 %v302, %v318
      %v323 = vmul.f32 %v303, %v318
      %v324 = vmul.f32 %v304, %v318
      %v325 = vmul.f32 %v305, %v318
      %v326 = vmul.f32 %v306, %v318
      %v327 = vmul.f32 %v307, %v318
      %v328 = vmul.f32 %v308, %v318
      %v329 = vmul.f32 %v309, %v318
      %v330 = vmul.f32 %v310, %v318
      %v331 = vmul.f32 %v311, %v318
      %v332 = vmul.f32 %v312, %v318
      %v333 = vmul.f32 %v313, %v318
      %v334 = vmul.f32 %v314, %v318
      %v335 = vmul.f32 %v315, %v318
      %v336 = vld [vmem:[%s2] sm:$0x1]
      %v338 = vperm.slane %v336, 0
      %v340 = vadd.f32 %v320, %v338
      %v341 = vadd.f32 %v321, %v338
      %v342 = vadd.f32 %v322, %v338
      %v343 = vadd.f32 %v323, %v338
      %v344 = vadd.f32 %v324, %v338
      %v345 = vadd.f32 %v325, %v338
      %v346 = vadd.f32 %v326, %v338
      %v347 = vadd.f32 %v327, %v338
      %v348 = vadd.f32 %v328, %v338
      %v349 = vadd.f32 %v329, %v338
      %v350 = vadd.f32 %v330, %v338
      %v351 = vadd.f32 %v331, %v338
      %v352 = vadd.f32 %v332, %v338
      %v353 = vadd.f32 %v333, %v338
      %v354 = vadd.f32 %v334, %v338
      %v355 = vadd.f32 %v335, %v338
      %v356 = vmax.f32 %v340, 0.0
      %v357 = vmax.f32 %v341, 0.0
      %v358 = vmax.f32 %v342, 0.0
      %v359 = vmax.f32 %v343, 0.0
      %v360 = vmax.f32 %v344, 0.0
      %v361 = vmax.f32 %v345, 0.0
      %v362 = vmax.f32 %v346, 0.0
      %v363 = vmax.f32 %v347, 0.0
      %v364 = vmax.f32 %v348, 0.0
      %v365 = vmax.f32 %v349, 0.0
      %v366 = vmax.f32 %v350, 0.0
      %v367 = vmax.f32 %v351, 0.0
      %v368 = vmax.f32 %v352, 0.0
      %v369 = vmax.f32 %v353, 0.0
      %v370 = vmax.f32 %v354, 0.0
      %v371 = vmax.f32 %v355, 0.0
      %v372 = vld [vmem:[%s287] sm:$0xf]
      %vm373 = vcmask 31744
      %v375 = vsel %vm373, %v356, 0
      %v378 = vsel %vm373, %v357, 0
      %v381 = vsel %vm373, %v358, 0
      %v384 = vsel %vm373, %v359, 0
      %v387 = vsel %vm373, %v360, 0
      %v390 = vsel %vm373, %v361, 0
      %v393 = vsel %vm373, %v362, 0
      %v396 = vsel %vm373, %v363, 0
      %v399 = vsel %vm373, %v364, 0
      %v402 = vsel %vm373, %v365, 0
      %v405 = vsel %vm373, %v366, 0
      %v408 = vsel %vm373, %v367, 0
      %v411 = vsel %vm373, %v368, 0
      %v414 = vsel %vm373, %v369, 0
      %v417 = vsel %vm373, %v370, 0
      %v420 = vsel %vm373, %v371, 0
      %vm422 = vcmask 1043456
      %v424 = vsel %vm422, %v372, 0
      %426 = vmatpush.msra.mxu0 0.0
      %427 = vmatpush.msra.mxu0 0.0
      %428 = vmatpush.msra.mxu0 0.0
      %429 = vmatpush.msra.mxu0 0.0
      %430 = vmatpush.msra.mxu0 0.0
      %431 = vmatpush.msra.mxu0 0.0
      %432 = vmatpush.msra.mxu0 0.0
      %433 = vmatpush.msra.mxu0 0.0
      %434 = vmatpush.msra.mxu0 0.0
      %435 = vmatpush.msra.mxu0 0.0
      %436 = vmatpush.msra.mxu0 0.0
      %437 = vmatpush.msra.mxu0 0.0
      %438 = vmatpush.msra.mxu0 0.0
      %439 = vmatpush.msra.mxu0 0.0
      %440 = vmatpush.msra.mxu0 0.0
      %441 = vmatpush.msra.mxu0 %v424
      %442 = vmatmul.f32.gmra.mxu0 %v375
      %v443 = vpop.f32.mrf.mxu0
      %v444 = vadd.f32 0.0, %v443
      %445 = vmatmul.f32.gmra.mxu0 %v378
      %v446 = vpop.f32.mrf.mxu0
      %v447 = vadd.f32 0.0, %v446
      %448 = vmatmul.f32.gmra.mxu0 %v381
      %v449 = vpop.f32.mrf.mxu0
      %v450 = vadd.f32 0.0, %v449
      %451 = vmatmul.f32.gmra.mxu0 %v384
      %v452 = vpop.f32.mrf.mxu0
      %v453 = vadd.f32 0.0, %v452
      %454 = vmatmul.f32.gmra.mxu0 %v387
      %v455 = vpop.f32.mrf.mxu0
      %v456 = vadd.f32 0.0, %v455
      %457 = vmatmul.f32.gmra.mxu0 %v390
      %v458 = vpop.f32.mrf.mxu0
      %v459 = vadd.f32 0.0, %v458
      %460 = vmatmul.f32.gmra.mxu0 %v393
      %v461 = vpop.f32.mrf.mxu0
      %v462 = vadd.f32 0.0, %v461
      %463 = vmatmul.f32.gmra.mxu0 %v396
      %v464 = vpop.f32.mrf.mxu0
      %v465 = vadd.f32 0.0, %v464
      %466 = vmatmul.f32.gmra.mxu0 %v399
      %v467 = vpop.f32.mrf.mxu0
      %v468 = vadd.f32 0.0, %v467
      %469 = vmatmul.f32.gmra.mxu0 %v402
      %v470 = vpop.f32.mrf.mxu0
      %v471 = vadd.f32 0.0, %v470
      %472 = vmatmul.f32.gmra.mxu0 %v405
      %v473 = vpop.f32.mrf.mxu0
      %v474 = vadd.f32 0.0, %v473
      %475 = vmatmul.f32.gmra.mxu0 %v408
      %v476 = vpop.f32.mrf.mxu0
      %v477 = vadd.f32 0.0, %v476
      %478 = vmatmul.f32.gmra.mxu0 %v411
      %v479 = vpop.f32.mrf.mxu0
      %v480 = vadd.f32 0.0, %v479
      %481 = vmatmul.f32.gmra.mxu0 %v414
      %v482 = vpop.f32.mrf.mxu0
      %v483 = vadd.f32 0.0, %v482
      %484 = vmatmul.f32.gmra.mxu0 %v417
      %v485 = vpop.f32.mrf.mxu0
      %v486 = vadd.f32 0.0, %v485
      %487 = vmatmul.f32.gmra.mxu0 %v420
      %v488 = vpop.f32.mrf.mxu0
      %v489 = vadd.f32 0.0, %v488
      %490 = vdwg.mxu0
      %p491 = scmp.eq.s32.totalorder %s23, 0
      // Predicated region
      $region41: #{transition_forward.1} parent=39 // pred_check
        %p492 = pneg %p491
      $region42: #{transition_forward.1} parent=39 // pred_check_branch
        %494 = sbr.rel (%p492) target = $region44
      $region43: #{transition_forward.1} parent=39 // pred_region
        %495 = vst [vmem:[#allocation2] sm:$0xff] %v444
        %496 = vst [vmem:[#allocation2 + $0x8] sm:$0xff] %v447
        %497 = vst [vmem:[#allocation2 + $0x10] sm:$0xff] %v450
        %498 = vst [vmem:[#allocation2 + $0x18] sm:$0xff] %v453
        %499 = vst [vmem:[#allocation2 + $0x20] sm:$0xff] %v456
        %500 = vst [vmem:[#allocation2 + $0x28] sm:$0xff] %v459
        %501 = vst [vmem:[#allocation2 + $0x30] sm:$0xff] %v462
        %502 = vst [vmem:[#allocation2 + $0x38] sm:$0xff] %v465
        %503 = vst [vmem:[#allocation2 + $0x40] sm:$0xff] %v468
        %504 = vst [vmem:[#allocation2 + $0x48] sm:$0xff] %v471
        %505 = vst [vmem:[#allocation2 + $0x50] sm:$0xff] %v474
        %506 = vst [vmem:[#allocation2 + $0x58] sm:$0xff] %v477
        %507 = vst [vmem:[#allocation2 + $0x60] sm:$0xff] %v480
        %508 = vst [vmem:[#allocation2 + $0x68] sm:$0xff] %v483
        %509 = vst [vmem:[#allocation2 + $0x70] sm:$0xff] %v486
        %510 = vst [vmem:[#allocation2 + $0x78] sm:$0xff] %v489
      $region44: #{transition_forward.1} parent=39 // pred_fallthru
        _
      %p511 = scmp.gt.s32.totalorder %s23, 0
      // Predicated region
      $region45: #{transition_forward.1} parent=39 // pred_check
        %p512 = pneg %p511
      $region46: #{transition_forward.1} parent=39 // pred_check_branch
        %514 = sbr.rel (%p512) target = $region48
      $region47: #{transition_forward.1} parent=39 // pred_region
        %v515 = vld [vmem:[#allocation2] sm:$0xff]
        %v516 = vld [vmem:[#allocation2 + $0x8] sm:$0xff]
        %v517 = vld [vmem:[#allocation2 + $0x10] sm:$0xff]
        %v518 = vld [vmem:[#allocation2 + $0x18] sm:$0xff]
        %v519 = vld [vmem:[#allocation2 + $0x20] sm:$0xff]
        %v520 = vld [vmem:[#allocation2 + $0x28] sm:$0xff]
        %v521 = vld [vmem:[#allocation2 + $0x30] sm:$0xff]
        %v522 = vld [vmem:[#allocation2 + $0x38] sm:$0xff]
        %v523 = vld [vmem:[#allocation2 + $0x40] sm:$0xff]
        %v524 = vld [vmem:[#allocation2 + $0x48] sm:$0xff]
        %v525 = vld [vmem:[#allocation2 + $0x50] sm:$0xff]
        %v526 = vld [vmem:[#allocation2 + $0x58] sm:$0xff]
        %v527 = vld [vmem:[#allocation2 + $0x60] sm:$0xff]
        %v528 = vld [vmem:[#allocation2 + $0x68] sm:$0xff]
        %v529 = vld [vmem:[#allocation2 + $0x70] sm:$0xff]
        %v530 = vld [vmem:[#allocation2 + $0x78] sm:$0xff]
        %v531 = vmax.f32 %v515, %v444
        %v532 = vmax.f32 %v516, %v447
        %v533 = vmax.f32 %v517, %v450
        %v534 = vmax.f32 %v518, %v453
        %v535 = vmax.f32 %v519, %v456
        %v536 = vmax.f32 %v520, %v459
        %v537 = vmax.f32 %v521, %v462
        %v538 = vmax.f32 %v522, %v465
        %v539 = vmax.f32 %v523, %v468
        %v540 = vmax.f32 %v524, %v471
        %v541 = vmax.f32 %v525, %v474
        %v542 = vmax.f32 %v526, %v477
        %v543 = vmax.f32 %v527, %v480
        %v544 = vmax.f32 %v528, %v483
        %v545 = vmax.f32 %v529, %v486
        %v546 = vmax.f32 %v530, %v489
        %547 = vst [vmem:[#allocation2] sm:$0xff] %v531
        %548 = vst [vmem:[#allocation2 + $0x8] sm:$0xff] %v532
        %549 = vst [vmem:[#allocation2 + $0x10] sm:$0xff] %v533
        %550 = vst [vmem:[#allocation2 + $0x18] sm:$0xff] %v534
        %551 = vst [vmem:[#allocation2 + $0x20] sm:$0xff] %v535
        %552 = vst [vmem:[#allocation2 + $0x28] sm:$0xff] %v536
        %553 = vst [vmem:[#allocation2 + $0x30] sm:$0xff] %v537
        %554 = vst [vmem:[#allocation2 + $0x38] sm:$0xff] %v538
        %555 = vst [vmem:[#allocation2 + $0x40] sm:$0xff] %v539
        %556 = vst [vmem:[#allocation2 + $0x48] sm:$0xff] %v540
        %557 = vst [vmem:[#allocation2 + $0x50] sm:$0xff] %v541
        %558 = vst [vmem:[#allocation2 + $0x58] sm:$0xff] %v542
        %559 = vst [vmem:[#allocation2 + $0x60] sm:$0xff] %v543
        %560 = vst [vmem:[#allocation2 + $0x68] sm:$0xff] %v544
        %561 = vst [vmem:[#allocation2 + $0x70] sm:$0xff] %v545
        %562 = vst [vmem:[#allocation2 + $0x78] sm:$0xff] %v546
      $region48: #{transition_forward.1} parent=39 // pred_fallthru
        _
      %p563 = scmp.eq.s32.totalorder %s23, 3
      // Predicated region
      $region49: #{transition_forward.1} parent=39 // pred_check
        %p564 = pneg %p563
      $region50: #{transition_forward.1} parent=39 // pred_check_branch
        %566 = sbr.rel (%p564) target = $region52
      $region51: #{transition_forward.1} parent=39 // pred_region
        %v567 = vld [vmem:[#allocation2] sm:$0xff]
        %v568 = vld [vmem:[#allocation2 + $0x8] sm:$0xff]
        %v569 = vld [vmem:[#allocation2 + $0x10] sm:$0xff]
        %v570 = vld [vmem:[#allocation2 + $0x18] sm:$0xff]
        %v571 = vld [vmem:[#allocation2 + $0x20] sm:$0xff]
        %v572 = vld [vmem:[#allocation2 + $0x28] sm:$0xff]
        %v573 = vld [vmem:[#allocation2 + $0x30] sm:$0xff]
        %v574 = vld [vmem:[#allocation2 + $0x38] sm:$0xff]
        %v575 = vld [vmem:[#allocation2 + $0x40] sm:$0xff]
        %v576 = vld [vmem:[#allocation2 + $0x48] sm:$0xff]
        %v577 = vld [vmem:[#allocation2 + $0x50] sm:$0xff]
        %v578 = vld [vmem:[#allocation2 + $0x58] sm:$0xff]
        %v579 = vld [vmem:[#allocation2 + $0x60] sm:$0xff]
        %v580 = vld [vmem:[#allocation2 + $0x68] sm:$0xff]
        %v581 = vld [vmem:[#allocation2 + $0x70] sm:$0xff]
        %v582 = vld [vmem:[#allocation2 + $0x78] sm:$0xff]
        %v583 = vld [vmem:[%s290] sm:$0x1]
        %v585 = vperm.slane %v583, 0
        %v587 = vadd.f32 %v567, %v585
        %v588 = vadd.f32 %v568, %v585
        %v589 = vadd.f32 %v569, %v585
        %v590 = vadd.f32 %v570, %v585
        %v591 = vadd.f32 %v571, %v585
        %v592 = vadd.f32 %v572, %v585
        %v593 = vadd.f32 %v573, %v585
        %v594 = vadd.f32 %v574, %v585
        %v595 = vadd.f32 %v575, %v585
        %v596 = vadd.f32 %v576, %v585
        %v597 = vadd.f32 %v577, %v585
        %v598 = vadd.f32 %v578, %v585
        %v599 = vadd.f32 %v579, %v585
        %v600 = vadd.f32 %v580, %v585
        %v601 = vadd.f32 %v581, %v585
        %v602 = vadd.f32 %v582, %v585
        %603 = vst [vmem:[%s298] sm:$0xff] %v587
        %604 = vst [vmem:[%s298 + $0x8] sm:$0xff] %v588
        %605 = vst [vmem:[%s298 + $0x10] sm:$0xff] %v589
        %606 = vst [vmem:[%s298 + $0x18] sm:$0xff] %v590
        %607 = vst [vmem:[%s298 + $0x20] sm:$0xff] %v591
        %608 = vst [vmem:[%s298 + $0x28] sm:$0xff] %v592
        %609 = vst [vmem:[%s298 + $0x30] sm:$0xff] %v593
        %610 = vst [vmem:[%s298 + $0x38] sm:$0xff] %v594
        %611 = vst [vmem:[%s298 + $0x40] sm:$0xff] %v595
        %612 = vst [vmem:[%s298 + $0x48] sm:$0xff] %v596
        %613 = vst [vmem:[%s298 + $0x50] sm:$0xff] %v597
        %614 = vst [vmem:[%s298 + $0x58] sm:$0xff] %v598
        %615 = vst [vmem:[%s298 + $0x60] sm:$0xff] %v599
        %616 = vst [vmem:[%s298 + $0x68] sm:$0xff] %v600
        %617 = vst [vmem:[%s298 + $0x70] sm:$0xff] %v601
        %618 = vst [vmem:[%s298 + $0x78] sm:$0xff] %v602
      $region52: #{transition_forward.1} parent=39 // pred_fallthru
        _
      %s619 = smul.u32 16, %s21
      %p620 = scmp.lt.s32.totalorder %s619, 15
      %s621 = scalar_select %p620, %s619, 15
      %p622 = scmp.lt.s32.totalorder %s22, 0
      %s623 = scalar_select %p622, %s22, 0
      %s624 = sadd.s32 %s623, %s621
      %s625 = smul.addr %s624, 8
      %s626 = scalar_lea.vmem %s5, %s625
      // Predicated region
      $region53: #{transition_forward.1} parent=39 // pred_check
        %p627 = pneg %p177
      $region54: #{transition_forward.1} parent=39 // pred_check_branch
        %629 = sbr.rel (%p627) target = $region56
      $region55: #{transition_forward.1} parent=39 // pred_region
        %s630 = smul.u32 16, %s21
      $region56: #{transition_forward.1} parent=39 // pred_fallthru
        _
      // Predicated region
      $region57: #{transition_forward.1} parent=39 // pred_check
        %p631 = pneg %p177
      $region58: #{transition_forward.1} parent=39 // pred_check_branch
        %633 = sbr.rel (%p631) target = $region60
      $region59: #{transition_forward.1} parent=39 // pred_region
        %s634 = smul.u32 16, %s21
        %p635 = scmp.lt.s32.totalorder %s634, 15
        %s636 = scalar_select %p635, %s634, 15
        %p637 = scmp.lt.s32.totalorder %s22, 0
        %s638 = scalar_select %p637, %s22, 0
        %s639 = sadd.s32 %s638, %s636
        %s640 = smul.addr %s639, 8
        %s641 = scalar_lea.vmem %s5, %s640
      $region60: #{transition_forward.1} parent=39 // pred_fallthru
        _
    $region40: #{transition_forward.1} parent=5 // pred_fallthru
      _
    %p642 = scmp.le.s32.totalorder 2, %s11
    // Predicated region
    $region61: #{transition_forward.1} parent=5 // pred_check
      %p643 = pneg %p642
    $region62: #{transition_forward.1} parent=5 // pred_check_branch
      %645 = sbr.rel (%p643) target = $region64
    $region63: #{transition_forward.1} parent=5 // pred_region
      %s646 = ssub.s32 %s11, 2
    $region64: #{transition_forward.1} parent=5 // pred_fallthru
      _
  $region6: #{transition_forward.1} parent=0 // loop_footer
    %s15 = sadd.s32 1, %s11
  $region7: #{transition_forward.1} parent=0 // loop_footer_branch
    %10 = sbr.rel target = $region3
  $region8: #{transition_forward.1} parent=0 // loop_exit
    _

</llo_original>
